<compile_context>
chip_gen: v7x
topology: tpu7x:2x2x1
jax: 0.10.0
libtpu: 0.0.40
codegen_flags: <defaults>
</compile_context>

<pallas_src>
import functools

import jax
import jax.numpy as jnp
from jax.experimental import pallas as pl
from jax.experimental.pallas import tpu as pltpu


# ---------------------------------------------------------------------------
# Kernels
# ---------------------------------------------------------------------------

def _rmsnorm_kernel(x_ref, scale_ref, o_ref, *, eps):
    """Standard path: features live on the (full) lane axis; reduce over it."""
    xf = x_ref[...].astype(jnp.float32)
    ms = jnp.mean(xf * xf, axis=-1, keepdims=True)              # (TR, 1)  f32
    inv = jax.lax.rsqrt(ms + eps)                                # EUP slot
    o_ref[...] = ((xf * inv) * scale_ref[...]).astype(o_ref.dtype)


def _rmsnorm_kernel_packed(x_ref, scale_ref, segmat_ref, o_ref, *, eps, inv_feat):
    """Lane-packed path: each kernel row holds k = 128 // F original rows.

    Per-lane segment sums are computed with an MXU matmul against a constant
    (128, 128) block-diagonal ones matrix (segmat).  To get ~f32 accuracy
    without relying on the matmul precision flag, xx is decomposed into two
    bf16 pieces (hi + lo) and the two bf16 matmuls are accumulated in f32.
    """
    xf = x_ref[...].astype(jnp.float32)
    xx = xf * xf                                                 # (TR, 128) f32
    hi = xx.astype(jnp.bfloat16)
    lo = (xx - hi.astype(jnp.float32)).astype(jnp.bfloat16)
    seg = segmat_ref[...]                                        # (128, 128) bf16, 0/1
    ssum = jnp.dot(hi, seg, preferred_element_type=jnp.float32)
    ssum = ssum + jnp.dot(lo, seg, preferred_element_type=jnp.float32)
    inv = jax.lax.rsqrt(ssum * inv_feat + eps)                   # per-lane segment mean
    o_ref[...] = ((xf * inv) * scale_ref[...]).astype(o_ref.dtype)


# ---------------------------------------------------------------------------
# Wrapper
# ---------------------------------------------------------------------------

def _vmem_capacity_bytes():
    try:
        return int(pltpu.get_tpu_info().vmem_capacity_bytes)
    except Exception:
        return 64 * 1024 * 1024          # conservative fallback (v7x per-TC VMEM)


def _choose_tile_rows(Rp, Fp, itemsize, vmem_limit):
    """Pick the row-tile size: big (~4 MiB) blocks, VMEM- and megacore-aware."""
    # Per tile row: double-buffered input + double-buffered output (input
    # dtype) + ~4 tile-sized f32 temporaries inside the kernel (xf, xx,
    # hi/lo/segment-sum live ranges, y).
    bytes_per_row = Fp * (4 * itemsize + 4 * 4)
    vmem_tr = max(8, ((vmem_limit * 6 // 10) // bytes_per_row // 8) * 8)

    # ~4 MiB input blocks amortize the ~0.35 us fixed cost per grid step
    # (a 4 MiB in+out stream is ~2.5 us even at v7x's 3.2 TB/s HBM).
    target = max(8, ((4 << 20) // (Fp * itemsize) // 8) * 8)

    tr = min(target, vmem_tr)
    if tr >= Rp:
        tr = Rp
    n_tiles = pl.cdiv(Rp, tr)

    # Megacore: v7x shards the "parallel" grid axis across 2 TensorCores.
    # If there is plenty of work but < 4 tiles, resize so each core gets
    # >= 2 tiles (keeps the per-core software pipeline alive), while tiles
    # stay >= ~1 MiB; on single-TC chips the extra steps cost <2%.
    min_tile_rows = max(8, ((1 << 20) // (Fp * itemsize) // 8) * 8)
    if n_tiles < 4 and Rp >= 4 * min_tile_rows:
        tr = max(min_tile_rows, ((pl.cdiv(Rp, 4) + 7) // 8) * 8)
    return tr


def rmsnorm(x, scale, eps=1e-8):
    """RMSNorm over the last axis of x, matching the PyTorch module."""
    orig_shape = x.shape
    F = orig_shape[-1]
    assert scale.shape == (F,), "scale must have shape (num_features,)"

    R = 1
    for d in orig_shape[:-1]:
        R *= d

    x2d = x.reshape(R, F)
    scale_f32 = scale.astype(jnp.float32)
    itemsize = jnp.dtype(x.dtype).itemsize

    # --- Lane-dense repacking for small F dividing 128 (ResNet case F = W = 16):
    # pack k = 128 // F rows per kernel row via a free contiguous reshape so
    # every load/store is a full 128-lane vector.  Rows are zero-padded when
    # R % k != 0 so this path never falls back to masked <128-lane stores.
    packed = (0 < F < 128) and (128 % F == 0)
    pad = 0
    if packed:
        k = 128 // F
        pad = (-R) % k
        if pad:
            x2d = jnp.concatenate([x2d, jnp.zeros((pad, F), x2d.dtype)], axis=0)
        Rp, Fp = (R + pad) // k, 128
        xk = x2d.reshape(Rp, Fp)
        scale_row = jnp.tile(scale_f32, k).reshape(1, Fp)
        # Block-diagonal ones matrix selecting each F-lane segment (0/1 -> exact in bf16).
        idx = jnp.arange(Fp, dtype=jnp.int32)
        segmat = (idx[:, None] // F == idx[None, :] // F).astype(jnp.bfloat16)
    else:
        # TODO(synk): pack/pad small F that does not divide 128 so stores stay lane-dense.
        Rp, Fp = R, F
        xk = x2d
        scale_row = scale_f32.reshape(1, Fp)

    vmem_cap = _vmem_capacity_bytes()
    vmem_limit = int(min((vmem_cap * 3) // 4, 96 * 1024 * 1024))
    tr = _choose_tile_rows(Rp, Fp, itemsize, vmem_limit)
    grid = (pl.cdiv(Rp, tr),)

    cost = pl.CostEstimate(
        flops=int(8 * Rp * Fp + (4 * Rp * Fp * Fp if packed else 2 * Rp * Fp)),
        transcendentals=int(Rp * (Fp if packed else 1)),
        bytes_accessed=int(2 * Rp * Fp * itemsize + Fp * 4),
    )

    x_spec = pl.BlockSpec((tr, Fp), lambda i: (i, 0))
    o_spec = pl.BlockSpec((tr, Fp), lambda i: (i, 0))
    # Constant index maps: Pallas DMAs these blocks once and re-uses them.
    scale_spec = pl.BlockSpec((1, Fp), lambda i: (0, 0))

    if packed:
        kernel = functools.partial(_rmsnorm_kernel_packed,
                                   eps=float(eps), inv_feat=1.0 / float(F))
        seg_spec = pl.BlockSpec((Fp, Fp), lambda i: (0, 0))
        in_specs = [x_spec, scale_spec, seg_spec]
        args = (xk, scale_row, segmat)
    else:
        kernel = functools.partial(_rmsnorm_kernel, eps=float(eps))
        in_specs = [x_spec, scale_spec]
        args = (xk, scale_row)

    out = pl.pallas_call(
        kernel,
        out_shape=jax.ShapeDtypeStruct((Rp, Fp), x.dtype),
        grid_spec=pltpu.PrefetchScalarGridSpec(
            num_scalar_prefetch=0,
            grid=grid,
            in_specs=in_specs,
            out_specs=o_spec,
        ),
        compiler_params=pltpu.CompilerParams(
            dimension_semantics=("parallel",),
            vmem_limit_bytes=vmem_limit,
        ),
        cost_estimate=cost,
    )(*args)

    if packed:
        out = out.reshape(Rp * (128 // F), F)
        if pad:
            out = out[:R]
    return out.reshape(orig_shape)


# ---------------------------------------------------------------------------
# Reference + tests
# ---------------------------------------------------------------------------

def _reference(x, scale, eps):
    xf = x.astype(jnp.float32)
    rms = jnp.sqrt(jnp.mean(xf ** 2, axis=-1, keepdims=True) + eps)
    return scale.astype(jnp.float32) * xf / rms


if __name__ == "__main__":
    key = jax.random.PRNGKey(0)
    k1, k2, k3, k4 = jax.random.split(key, 4)
    eps = 1e-8

    # 1) The module's case: NCHW input, normalize over W=16, scale = ones (init).
    #    Exercises the lane-packed (F=16 -> 128-lane) MXU-reduction path.
    B, C, H, W = 2, 4, 16, 16
    x1 = jax.random.normal(k1, (B, C, H, W), dtype=jnp.float32)
    s1 = jnp.ones((W,), dtype=jnp.float32)
    y1 = rmsnorm(x1, s1, eps)
    jax.block_until_ready(y1)
    assert jnp.allclose(y1, _reference(x1, s1, eps), atol=2e-5, rtol=2e-5), \
        "mismatch (packed, ones scale)"

    # 2) Same shape with a non-trivial scale (validates the tiled-scale packing).
    s2 = 0.5 + jax.random.uniform(k2, (W,), dtype=jnp.float32)
    y2 = rmsnorm(x1, s2, eps)
    jax.block_until_ready(y2)
    assert jnp.allclose(y2, _reference(x1, s2, eps), atol=2e-5, rtol=2e-5), \
        "mismatch (packed, random scale)"

    # 3) Row count not divisible by the packing factor -> zero-pad rows path.
    x3 = jax.random.normal(k3, (3, 5, 16), dtype=jnp.float32)
    y3 = rmsnorm(x3, s2, eps)
    jax.block_until_ready(y3)
    assert jnp.allclose(y3, _reference(x3, s2, eps), atol=2e-5, rtol=2e-5), \
        "mismatch (packed, padded rows)"

    # 4) Lane-dense standard path (F multiple of 128), f32.
    x4 = jax.random.normal(k3, (2, 8, 256), dtype=jnp.float32)
    s4 = 0.5 + jax.random.uniform(k4, (256,), dtype=jnp.float32)
    y4 = rmsnorm(x4, s4, eps)
    jax.block_until_ready(y4)
    assert jnp.allclose(y4, _reference(x4, s4, eps), atol=2e-5, rtol=2e-5), \
        "mismatch (standard, f32)"

    # 5) bf16 input: all math in f32, single cast at the store.
    x5 = x4.astype(jnp.bfloat16)
    y5 = rmsnorm(x5, s4, eps)
    jax.block_until_ready(y5)
    assert jnp.allclose(y5.astype(jnp.float32), _reference(x5, s4, eps),
                        atol=2e-2, rtol=2e-2), "mismatch (standard, bf16)"

    print("KERNEL_OK")
</pallas_src>

<mosaic_0001>
module attributes {stable_mosaic.version = 11 : i64} {
  func.func @_rmsnorm_kernel_packed(%arg0: i32, %arg1: memref<16x128xf32, #tpu.memory_space<vmem>>, %arg2: memref<1x128xf32, #tpu.memory_space<vmem>>, %arg3: memref<128x128xbf16, #tpu.memory_space<vmem>>, %arg4: memref<16x128xf32, #tpu.memory_space<vmem>>) attributes {dimension_semantics = [#tpu.dimension_semantics<parallel>], iteration_bounds = array<i64: 1>, scalar_prefetch = 0 : i64, scratch_operands = 0 : i64, tpu.core_type = #tpu.core_type<tc>, window_params = [{transform_indices = @transform_0, window_bounds = array<i64: 16, 128>}, {pipeline_mode = #tpu.pipeline_mode<synchronous>, transform_indices = @transform_1, window_bounds = array<i64: 1, 128>}, {pipeline_mode = #tpu.pipeline_mode<synchronous>, transform_indices = @transform_2, window_bounds = array<i64: 128, 128>}, {transform_indices = @transform_3, window_bounds = array<i64: 16, 128>}]} {
    %c0 = arith.constant 0 : index
    %c0_0 = arith.constant 0 : index
    %0 = vector.load %arg1[%c0, %c0_0] : memref<16x128xf32, #tpu.memory_space<vmem>>, vector<16x128xf32>
    %1 = arith.mulf %0, %0 : vector<16x128xf32>
    %2 = arith.truncf %1 : vector<16x128xf32> to vector<16x128xbf16>
    %3 = arith.extf %2 : vector<16x128xbf16> to vector<16x128xf32>
    %4 = arith.subf %1, %3 : vector<16x128xf32>
    %5 = arith.truncf %4 : vector<16x128xf32> to vector<16x128xbf16>
    %c0_1 = arith.constant 0 : index
    %c0_2 = arith.constant 0 : index
    %6 = vector.load %arg3[%c0_1, %c0_2] : memref<128x128xbf16, #tpu.memory_space<vmem>>, vector<128x128xbf16>
    %cst = arith.constant dense<0.000000e+00> : vector<16x128xf32>
    %7 = tpu.matmul %2, %6, %cst {dimension_numbers = #tpu.dot_dimension_numbers<[1], [0], [0], [1], [0, 0, 1, 1], [], []>} : vector<16x128xbf16>, vector<128x128xbf16>, vector<16x128xf32> -> vector<16x128xf32>
    %cst_3 = arith.constant dense<0.000000e+00> : vector<16x128xf32>
    %8 = tpu.matmul %5, %6, %cst_3 {dimension_numbers = #tpu.dot_dimension_numbers<[1], [0], [0], [1], [0, 0, 1, 1], [], []>} : vector<16x128xbf16>, vector<128x128xbf16>, vector<16x128xf32> -> vector<16x128xf32>
    %9 = arith.addf %7, %8 : vector<16x128xf32>
    %cst_4 = arith.constant 6.250000e-02 : f32
    %10 = vector.broadcast %cst_4 : f32 to vector<16x128xf32>
    %11 = arith.mulf %9, %10 : vector<16x128xf32>
    %cst_5 = arith.constant 9.99999993E-9 : f32
    %12 = vector.broadcast %cst_5 : f32 to vector<16x128xf32>
    %13 = arith.addf %11, %12 : vector<16x128xf32>
    %14 = math.rsqrt %13 : vector<16x128xf32>
    %15 = arith.mulf %0, %14 : vector<16x128xf32>
    %c0_6 = arith.constant 0 : index
    %c0_7 = arith.constant 0 : index
    %16 = vector.load %arg2[%c0_6, %c0_7] : memref<1x128xf32, #tpu.memory_space<vmem>>, vector<1x128xf32>
    %17 = vector.broadcast %16 : vector<1x128xf32> to vector<16x128xf32>
    %18 = arith.mulf %15, %17 : vector<16x128xf32>
    %c0_8 = arith.constant 0 : index
    %c0_9 = arith.constant 0 : index
    %19 = vector.load %arg4[%c0_8, %c0_9] : memref<16x128xf32, #tpu.memory_space<vmem>>, vector<16x128xf32>
    tpu.vector_store %arg4[%c0_8, %c0_9], %18 {strides = array<i32>} : memref<16x128xf32, #tpu.memory_space<vmem>>, vector<16x128xf32>,
    return
  }
  func.func @transform_0(%arg0: i32) -> (i32, i32) {
    %c0_i32 = arith.constant 0 : i32
    %c0_i32_0 = arith.constant 0 : i32
    return %arg0, %c0_i32 : i32, i32
  }
  func.func @transform_1(%arg0: i32) -> (i32, i32) {
    %c0_i32 = arith.constant 0 : i32
    %c0_i32_0 = arith.constant 0 : i32
    %c0_i32_1 = arith.constant 0 : i32
    return %c0_i32, %c0_i32_0 : i32, i32
  }
  func.func @transform_2(%arg0: i32) -> (i32, i32) {
    %c0_i32 = arith.constant 0 : i32
    %c0_i32_0 = arith.constant 0 : i32
    %c0_i32_1 = arith.constant 0 : i32
    return %c0_i32, %c0_i32_0 : i32, i32
  }
  func.func @transform_3(%arg0: i32) -> (i32, i32) {
    %c0_i32 = arith.constant 0 : i32
    %c0_i32_0 = arith.constant 0 : i32
    return %arg0, %c0_i32 : i32, i32
  }
}

</mosaic_0001>

<llo_original>
// kernel: tpu_custom_call.1
$region0: #{tpu_custom_call.1}
  #allocation0 [shape = 'u32[]', space=smem, size = 0x4, offset = 0x4, fixed_abs, tag = 'smem constant byte address 0x4 - core index']
  #allocation1 [shape = 'u32[144,128]{1,0:T(1,128)}', space=vmem, size = 0x12000, scoped, tag = 'internal scratch']
  %s0 = inlined_call_operand.hbm [shape: f32[16,128], index: 0, kind: input, shape index: {}]
  %s1 = inlined_call_operand.vmem [shape: f32[1,128], index: 1, kind: input, shape index: {}]
  %s2 = inlined_call_operand.hbm [shape: bf16[128,128], index: 2, kind: input, shape index: {}]
  %s3 = inlined_call_operand.hbm [shape: f32[16,128], index: 3, kind: output, shape index: {}]
  %s4 = sld [smem:[#allocation0]]
  $region30: #{tpu_custom_call.1} parent=0
    _
  %s6 = ssub.s32 1, %s4
  %s7 = scalar_select 0, %s6, %s4
  $region1: #{tpu_custom_call.1} parent=0
    #allocation2 [shape = 'u8[8192]{0}', space=vmem, size = 0x2000, scoped, tag = 'input window, operand 0, single buffered']
    #allocation3 [shape = 's32[1]{0}', space=sflag, size = 0x4, scoped, tag = 'scoped memory for tpu_custom_call.1']
    #allocation4 [shape = 's32[1]{0}', space=sflag, size = 0x4, scoped, tag = 'scoped memory for tpu_custom_call.1']
    #allocation5 [shape = 'u8[32768]{0}', space=vmem, size = 0x8000, scoped, tag = 'input window, operand 2, single buffered']
    #allocation6 [shape = 's32[1]{0}', space=sflag, size = 0x4, scoped, tag = 'scoped memory for tpu_custom_call.1']
    #allocation7 [shape = 'u8[8192]{0}', space=vmem, size = 0x2000, scoped, tag = 'output window, operand 0, single buffered']
    %8 = vsyncpa [#allocation3], 0
    %9 = vsyncpa [#allocation6], 0
    %10 = vsyncpa [#allocation4], 0
    // Predicated region
    $region2: #{tpu_custom_call.1} parent=1 // pred_check
      _
    $region3: #{tpu_custom_call.1} parent=1 // pred_check_branch
      %12 = sbr.rel (0) target = $region5
    $region4: #{tpu_custom_call.1} parent=1 // pred_region
      %s14 = ssub.s32 256, 256
      %15 = vsyncadd [#allocation3], %s14
      %s16 = sshll.u32 [#allocation2], 4
      %s17 = int_to_ptr.vmem [resolvable:$true] %s16
      %22 = dma.hbm_to_vmem [thread:$0]  %s0, 256, %s17, [#allocation3], 128, 128, 8
    $region5: #{tpu_custom_call.1} parent=1 // pred_fallthru
      _
    // Predicated region
    $region6: #{tpu_custom_call.1} parent=1 // pred_check
      _
    $region7: #{tpu_custom_call.1} parent=1 // pred_check_branch
      %24 = sbr.rel (0) target = $region9
    $region8: #{tpu_custom_call.1} parent=1 // pred_region
      _
    $region9: #{tpu_custom_call.1} parent=1 // pred_fallthru
      _
    // Predicated region
    $region10: #{tpu_custom_call.1} parent=1 // pred_check
      _
    $region11: #{tpu_custom_call.1} parent=1 // pred_check_branch
      %26 = sbr.rel (0) target = $region13
    $region12: #{tpu_custom_call.1} parent=1 // pred_region
      %s28 = ssub.s32 1024, 1024
      %29 = vsyncadd [#allocation6], %s28
      %s30 = sshll.u32 [#allocation5], 4
      %s31 = int_to_ptr.vmem [resolvable:$true] %s30
      %36 = dma.hbm_to_vmem [thread:$0]  %s2, 1024, %s31, [#allocation6], 64, 64, 4
    $region13: #{tpu_custom_call.1} parent=1 // pred_fallthru
      _
    // Predicated region
    $region14: #{tpu_custom_call.1} parent=1 // pred_check
      _
    $region15: #{tpu_custom_call.1} parent=1 // pred_check_branch
      %38 = sbr.rel (0) target = $region17
    $region16: #{tpu_custom_call.1} parent=1 // pred_region
      %39 = dma.done [#allocation3], 256
    $region17: #{tpu_custom_call.1} parent=1 // pred_fallthru
      _
    // Predicated region
    $region18: #{tpu_custom_call.1} parent=1 // pred_check
      _
    $region19: #{tpu_custom_call.1} parent=1 // pred_check_branch
      %41 = sbr.rel (0) target = $region21
    $region20: #{tpu_custom_call.1} parent=1 // pred_region
      %42 = dma.done [#allocation6], 1024
    $region21: #{tpu_custom_call.1} parent=1 // pred_fallthru
      _
    %v44 = vld [vmem:[#allocation2] sm:$0xff]
    %v45 = vld [vmem:[#allocation2 + $0x8] sm:$0xff]
    %v46 = vmul.f32 %v44, %v44
    %v47 = vmul.f32 %v45, %v45
    %v48 = vpack.c.bf16 %v47, %v46
    %v49 = vunpack.c.l.bf16 %v48
    %v50 = vunpack.c.h.bf16 %v48
    %v51 = vsub.f32 %v46, %v49
    %v52 = vsub.f32 %v47, %v50
    %v53 = vpack.c.bf16 %v52, %v51
    %v54 = vld [vmem:[#allocation5] sm:$0xf]
    %v55 = vld [vmem:[#allocation5 + $0x4] sm:$0xf]
    %v56 = vld [vmem:[#allocation5 + $0x8] sm:$0xf]
    %v57 = vld [vmem:[#allocation5 + $0xc] sm:$0xf]
    %v58 = vld [vmem:[#allocation5 + $0x10] sm:$0xf]
    %v59 = vld [vmem:[#allocation5 + $0x14] sm:$0xf]
    %v60 = vld [vmem:[#allocation5 + $0x18] sm:$0xf]
    %v61 = vld [vmem:[#allocation5 + $0x1c] sm:$0xf]
    %v62 = vld [vmem:[#allocation5 + $0x20] sm:$0xf]
    %v63 = vld [vmem:[#allocation5 + $0x24] sm:$0xf]
    %v64 = vld [vmem:[#allocation5 + $0x28] sm:$0xf]
    %v65 = vld [vmem:[#allocation5 + $0x2c] sm:$0xf]
    %v66 = vld [vmem:[#allocation5 + $0x30] sm:$0xf]
    %v67 = vld [vmem:[#allocation5 + $0x34] sm:$0xf]
    %v68 = vld [vmem:[#allocation5 + $0x38] sm:$0xf]
    %v69 = vld [vmem:[#allocation5 + $0x3c] sm:$0xf]
    %v86 = vunpack.c.l.b16 %v54
    %v87 = vunpack.c.l.b16 %v55
    %v88 = vunpack.c.l.b16 %v56
    %v89 = vunpack.c.l.b16 %v57
    %v90 = vunpack.c.l.b16 %v58
    %v91 = vunpack.c.l.b16 %v59
    %v92 = vunpack.c.l.b16 %v60
    %v93 = vunpack.c.l.b16 %v61
    %v94 = vunpack.c.l.b16 %v62
    %v95 = vunpack.c.l.b16 %v63
    %v96 = vunpack.c.l.b16 %v64
    %v97 = vunpack.c.l.b16 %v65
    %v98 = vunpack.c.l.b16 %v66
    %v99 = vunpack.c.l.b16 %v67
    %v100 = vunpack.c.l.b16 %v68
    %v101 = vunpack.c.l.b16 %v69
    %v102 = vpack.c.b16 %v87, %v86
    %v103 = vpack.c.b16 %v89, %v88
    %v104 = vpack.c.b16 %v91, %v90
    %v105 = vpack.c.b16 %v93, %v92
    %v106 = vpack.c.b16 %v95, %v94
    %v107 = vpack.c.b16 %v97, %v96
    %v108 = vpack.c.b16 %v99, %v98
    %v109 = vpack.c.b16 %v101, %v100
    %118 = vmatprep.subr.bf16.mxu0 0
    %119 = vmatpush1.bf16.msra.mxu0 %v102
    %120 = vmatprep.subr.bf16.mxu0 0
    %121 = vmatpush1.bf16.msra.mxu0 %v103
    %122 = vmatprep.subr.bf16.mxu0 0
    %123 = vmatpush1.bf16.msra.mxu0 %v104
    %124 = vmatprep.subr.bf16.mxu0 0
    %125 = vmatpush1.bf16.msra.mxu0 %v105
    %126 = vmatprep.subr.bf16.mxu0 0
    %127 = vmatpush1.bf16.msra.mxu0 %v106
    %128 = vmatprep.subr.bf16.mxu0 0
    %129 = vmatpush1.bf16.msra.mxu0 %v107
    %130 = vmatprep.subr.bf16.mxu0 0
    %131 = vmatpush1.bf16.msra.mxu0 %v108
    %132 = vmatprep.subr.bf16.mxu0 0
    %133 = vmatpush1.bf16.msra.mxu0 %v109
    %134 = vmatprep.subr.bf16.mxu0 0
    %135 = vmatpush1.bf16.msra.mxu0 0
    %136 = vmatprep.subr.bf16.mxu0 0
    %137 = vmatpush1.bf16.msra.mxu0 0
    %138 = vmatprep.subr.bf16.mxu0 0
    %139 = vmatpush1.bf16.msra.mxu0 0
    %140 = vmatprep.subr.bf16.mxu0 0
    %141 = vmatpush1.bf16.msra.mxu0 0
    %142 = vmatprep.subr.bf16.mxu0 0
    %143 = vmatpush1.bf16.msra.mxu0 0
    %144 = vmatprep.subr.bf16.mxu0 0
    %145 = vmatpush1.bf16.msra.mxu0 0
    %146 = vmatprep.subr.bf16.mxu0 0
    %147 = vmatpush1.bf16.msra.mxu0 0
    %148 = vmatprep.subr.bf16.mxu0 0
    %149 = vmatpush1.bf16.msra.mxu0 0
    %150 = vmatprep.mubr.bf16.mxu0 0
    %151 = vmatmul.mubr.bf16.gmra.mrb[0].mxu0 %v53
    %v152 = vpop.f32.mrb[0].mxu0
    %v153 = vadd.f32 0.0, %v152
    %v154 = vpop.f32.mrb[0].mxu0
    %v155 = vpop.f32.mrb[0].mxu0
    %v156 = vadd.f32 0.0, %v155
    %v157 = vpop.f32.mrb[0].mxu0
    %158 = vdwg.mxu0
    %159 = vmatprep.subr.bf16.mxu0 0
    %160 = vmatpush1.bf16.msra.mxu0 %v102
    %161 = vmatprep.subr.bf16.mxu0 0
    %162 = vmatpush1.bf16.msra.mxu0 %v103
    %163 = vmatprep.subr.bf16.mxu0 0
    %164 = vmatpush1.bf16.msra.mxu0 %v104
    %165 = vmatprep.subr.bf16.mxu0 0
    %166 = vmatpush1.bf16.msra.mxu0 %v105
    %167 = vmatprep.subr.bf16.mxu0 0
    %168 = vmatpush1.bf16.msra.mxu0 %v106
    %169 = vmatprep.subr.bf16.mxu0 0
    %170 = vmatpush1.bf16.msra.mxu0 %v107
    %171 = vmatprep.subr.bf16.mxu0 0
    %172 = vmatpush1.bf16.msra.mxu0 %v108
    %173 = vmatprep.subr.bf16.mxu0 0
    %174 = vmatpush1.bf16.msra.mxu0 %v109
    %175 = vmatprep.subr.bf16.mxu0 0
    %176 = vmatpush1.bf16.msra.mxu0 0
    %177 = vmatprep.subr.bf16.mxu0 0
    %178 = vmatpush1.bf16.msra.mxu0 0
    %179 = vmatprep.subr.bf16.mxu0 0
    %180 = vmatpush1.bf16.msra.mxu0 0
    %181 = vmatprep.subr.bf16.mxu0 0
    %182 = vmatpush1.bf16.msra.mxu0 0
    %183 = vmatprep.subr.bf16.mxu0 0
    %184 = vmatpush1.bf16.msra.mxu0 0
    %185 = vmatprep.subr.bf16.mxu0 0
    %186 = vmatpush1.bf16.msra.mxu0 0
    %187 = vmatprep.subr.bf16.mxu0 0
    %188 = vmatpush1.bf16.msra.mxu0 0
    %189 = vmatprep.subr.bf16.mxu0 0
    %190 = vmatpush1.bf16.msra.mxu0 0
    %191 = vmatprep.mubr.bf16.mxu0 0
    %192 = vmatmul.mubr.bf16.gmra.mrb[0].mxu0 %v48
    %v193 = vpop.f32.mrb[0].mxu0
    %v194 = vadd.f32 %v153, %v193
    %v195 = vpop.f32.mrb[0].mxu0
    %v196 = vpop.f32.mrb[0].mxu0
    %v197 = vadd.f32 %v156, %v196
    %v198 = vpop.f32.mrb[0].mxu0
    %199 = vdwg.mxu0
    %v200 = vmul.f32 %v194, 0.0625
    %v201 = vmul.f32 %v197, 0.0625
    %v202 = vadd.f32 %v200, 1e-08
    %v203 = vadd.f32 %v201, 1e-08
    %v204 = vrsqrt.pop %v202
    %v205 = vrsqrt.pop %v203
    %v206 = vmul.f32 %v44, %v204
    %v207 = vmul.f32 %v45, %v205
    %v208 = vld [vmem:[%s1] sm:$0x1]
    %v210 = vlaneseq
    %v211 = vshrl.u32 %v210, 7
    %v212 = vsub.s32 0, %v211
    %v213 = vrot.slane %v208, %v212
    %v215 = vmul.f32 %v206, %v213
    %v216 = vmul.f32 %v207, %v213
    %217 = vst [vmem:[#allocation7] sm:$0xff] %v215
    %218 = vst [vmem:[#allocation7 + $0x8] sm:$0xff] %v216
    // Predicated region
    $region22: #{tpu_custom_call.1} parent=1 // pred_check
      _
    $region23: #{tpu_custom_call.1} parent=1 // pred_check_branch
      %220 = sbr.rel (0) target = $region25
    $region24: #{tpu_custom_call.1} parent=1 // pred_region
      %s222 = ssub.s32 256, 256
      %223 = vsyncadd [#allocation4], %s222
      %s224 = sshll.u32 [#allocation7], 4
      %s225 = int_to_ptr.vmem [resolvable:$true] %s224
      %230 = dma.vmem_to_hbm [thread:$0]  %s225, 256, %s3, [#allocation4], 128, 128, 8
    $region25: #{tpu_custom_call.1} parent=1 // pred_fallthru
      _
    // Predicated region
    $region26: #{tpu_custom_call.1} parent=1 // pred_check
      _
    $region27: #{tpu_custom_call.1} parent=1 // pred_check_branch
      %232 = sbr.rel (0) target = $region29
    $region28: #{tpu_custom_call.1} parent=1 // pred_region
      %233 = dma.done [#allocation4], 256
    $region29: #{tpu_custom_call.1} parent=1 // pred_fallthru
      _
    %234 = vsyncpa [#allocation3], 1
    %235 = vsyncpa [#allocation6], 1
    %236 = vsyncpa [#allocation4], 1

</llo_original>
